<compile_context>
chip_gen: v5e
topology: v5e:2x2
jax: 0.10.0
libtpu: 0.0.40
codegen_flags: <defaults>
</compile_context>

<pallas_src>
import math

import jax
import jax.numpy as jnp
from jax.experimental import pallas as pl
from jax.experimental.pallas import tpu as pltpu


# ---------------------------------------------------------------------------
# Fused kernel: gridded matmul (reduction over D) + entropy/loss epilogue.
#
#   grid = (D // tk,)   -- reduction axis, "arbitrary"
#   margin : (1,) f32  SMEM   runtime scalar (no recompile on change)
#   nvalid : (1,) i32  SMEM   number of valid (un-padded) batch rows
#   x block: [Bp, tk]  f32    (cast to bf16 in-kernel; Bp = batch pad to 16)
#   w block: [tk, K]   bf16   (K = 128 classes -> exactly one lane tile)
#   b block: [1,  K]   f32
#   logits : [Bp, K]   f32    OUTPUT, doubles as the resident accumulator
# ---------------------------------------------------------------------------
def fused_linear_entropy_kernel(margin_ref, nvalid_ref, x_ref, w_ref, b_ref,
                                logits_ref, ent_ref, loss_ref):
    k = pl.program_id(0)
    nk = pl.num_programs(0)

    @pl.when(k == 0)
    def _init():
        # Fold the bias add into the accumulator init (single broadcast).
        logits_ref[...] = jnp.broadcast_to(b_ref[...], logits_ref.shape)

    # bf16 MXU matmul (x cast per block in VMEM), f32 accumulation directly
    # into the VMEM-resident output block.
    logits_ref[...] += jnp.dot(x_ref[...].astype(jnp.bfloat16), w_ref[...],
                               preferred_element_type=jnp.float32)

    @pl.when(k == nk - 1)
    def _finalize():
        acc = logits_ref[...]                                  # [Bp, K] f32

        # softmax entropy, simplified:
        #   ent = log(s) - sum(ex * (x - m)) / s ,  ex = exp(x - m), s = sum(ex)
        # Exact divide: it runs once on a [Bp,1] vector, so it is free and
        # keeps exact parity with the reference for samples near the margin.
        m = jnp.max(acc, axis=1, keepdims=True)                # [Bp, 1]
        xm = acc - m
        ex = jnp.exp(xm)
        s = jnp.sum(ex, axis=1, keepdims=True)                 # [Bp, 1]
        ent = jnp.log(s) - jnp.sum(ex * xm, axis=1, keepdims=True) / s

        # Lane-dense (unmasked) store of the per-sample entropy (broadcast
        # across the 128 lanes; wrapper reads column 0).  Negligible at this
        # batch size; see TODO above for the large-batch layout.
        ent_ref[...] = jnp.broadcast_to(ent, ent_ref.shape)

        # Margin filter + masked mean.  Padded batch rows are excluded, and
        # masked rows are zeroed BEFORE the multiply so garbage / padded rows
        # can never poison the sum.  0/0 -> NaN matches torch.mean over an
        # empty tensor.
        row = jax.lax.broadcasted_iota(jnp.int32, ent.shape, 0)
        sel = (ent < margin_ref[0]) & (row < nvalid_ref[0])
        cnt = jnp.sum(sel.astype(jnp.float32))
        loss_ref[0] = jnp.sum(jnp.where(sel, ent, 0.0)) / cnt   # 0/0 -> NaN


def _choose_tk(Bp, D, K, *, x_bytes=4, w_bytes=2, budget_bytes=12 << 20):
    """Pick the reduction tile so the double-buffered streams fit a
    conservative VMEM budget (safe on v5e 16 MiB scoped / v7x 64 MiB phys).
    Prefer a single grid step (no ~0.35 us per-step overhead) when it fits."""
    per_tk = 2 * (Bp * x_bytes + K * w_bytes)       # double-buffered x + w
    if D % 128 != 0 or D * per_tk <= budget_bytes:
        return D                                    # single block / full dim
    tk = max(128, (budget_bytes // per_tk) // 128 * 128)
    tk = min(tk, D)
    while tk > 128 and D % tk != 0:
        tk -= 128
    return tk                                       # 128 always divides D here


def fused_linear_entropy(x_flat, w, b, margin, valid_rows):
    """x_flat: [Bp, D] f32, w: [D, K] bf16, b: [1, K] f32, margin: f32 scalar."""
    Bp, D = x_flat.shape
    Dw, K = w.shape
    assert D == Dw and b.shape == (1, K)

    tk = _choose_tk(Bp, D, K)
    grid = (D // tk,)

    # Runtime scalars -> SMEM (no Mosaic recompile when margin / batch change).
    margin_arr = jnp.reshape(jnp.asarray(margin, jnp.float32), (1,))
    nvalid_arr = jnp.full((1,), valid_rows, dtype=jnp.int32)

    # Rough per-call VMEM estimate; only raise the scoped limit if we would
    # exceed the smallest default (v5e 16 MiB).  With the 12 MiB stream budget
    # above this stays off at all supported shapes.
    est = 2 * tk * (Bp * 4 + K * 2) + 4 * Bp * K * 4 + 2 * K * 4
    cp_kwargs = dict(dimension_semantics=("arbitrary",))
    if est > (12 << 20):
        cp_kwargs["vmem_limit_bytes"] = min(int(est * 3 // 2), 48 << 20)

    return pl.pallas_call(
        fused_linear_entropy_kernel,
        out_shape=(
            jax.ShapeDtypeStruct((Bp, K), jnp.float32),   # logits (accumulator)
            jax.ShapeDtypeStruct((Bp, K), jnp.float32),   # entropy (lane-bcast)
            jax.ShapeDtypeStruct((1,), jnp.float32),      # loss (SMEM scalar)
        ),
        grid_spec=pltpu.PrefetchScalarGridSpec(
            num_scalar_prefetch=0,
            grid=grid,
            in_specs=[
                pl.BlockSpec(memory_space=pltpu.MemorySpace.SMEM),  # margin
                pl.BlockSpec(memory_space=pltpu.MemorySpace.SMEM),  # nvalid
                pl.BlockSpec((Bp, tk), lambda k: (0, k)),           # x (f32)
                pl.BlockSpec((tk, K), lambda k: (k, 0)),            # w (bf16)
                pl.BlockSpec((1, K), lambda k: (0, 0)),             # bias
            ],
            out_specs=(
                pl.BlockSpec((Bp, K), lambda k: (0, 0)),            # logits
                pl.BlockSpec((Bp, K), lambda k: (0, 0)),            # entropy
                pl.BlockSpec(memory_space=pltpu.MemorySpace.SMEM),  # loss
            ),
        ),
        compiler_params=pltpu.CompilerParams(**cp_kwargs),
    )(margin_arr, nvalid_arr, x_flat, w, b)


# ---------------------------------------------------------------------------
# DCT forward (one adaptation step, forward-only semantics), fully on-device.
# EMA is carried as (value, valid) device scalars so there is no host sync;
# margin is a runtime scalar so varying it never recompiles the kernel.
# ---------------------------------------------------------------------------
@jax.jit
def dct_forward(x_nchw, w_bf16, b, margin, ema_val, ema_valid,
                reset_constant_em=0.2):
    B = x_nchw.shape[0]
    x_flat = x_nchw.reshape(B, -1)                 # glue: flatten NCHW (f32)

    # Pad the batch to a multiple of 16 (bf16 vreg packs [16,128] sublanes).
    Bp = ((B + 15) // 16) * 16
    if Bp != B:
        x_flat = jnp.pad(x_flat, ((0, Bp - B), (0, 0)))

    logits_p, ent_p, loss_v = fused_linear_entropy(
        x_flat, w_bf16, b, margin, valid_rows=B)

    outputs = logits_p[:B]
    entropys = ent_p[:B, 0]
    loss = loss_v[0]

    # update_ema(ema, loss) only when loss is not NaN (as in the torch module).
    loss_ok = jnp.logical_not(jnp.isnan(loss))
    new_ema_val = jnp.where(
        loss_ok,
        jnp.where(ema_valid, 0.9 * ema_val + 0.1 * loss, loss),
        ema_val)
    new_ema_valid = jnp.logical_or(ema_valid, loss_ok)
    reset_flag = jnp.logical_and(new_ema_valid, new_ema_val < reset_constant_em)
    return outputs, entropys, loss, new_ema_val, new_ema_valid, reset_flag


# ---------------------------------------------------------------------------
# Plain-JAX references for validation.
# ---------------------------------------------------------------------------
def ref_forward(x_nchw, w_bf16, b, margin):
    B = x_nchw.shape[0]
    x_flat = x_nchw.reshape(B, -1).astype(jnp.bfloat16)
    logits = jnp.dot(x_flat, w_bf16, preferred_element_type=jnp.float32) + b
    logp = jax.nn.log_softmax(logits, axis=1)
    ent = -jnp.sum(jnp.exp(logp) * logp, axis=1)
    sel = (ent < margin).astype(jnp.float32)
    loss = jnp.sum(ent * sel) / jnp.sum(sel)                  # NaN if none pass
    return logits, ent, loss


if __name__ == "__main__":
    # Small deterministic setup (synthetic linear classifier as `model`).
    B, C, H, W = 6, 4, 16, 16           # B=6 also exercises the batch padding
    D = C * H * W                        # 1024
    K = 128                              # number of classes
    margin_e0 = 0.4 * math.log(K)        # analogue of 0.4 * log(1000)
    margin_wide = 2.0 * math.log(K)      # second step: every sample passes

    key = jax.random.PRNGKey(0)
    kx, kw = jax.random.split(key, 2)
    x = jax.random.normal(kx, (B, C, H, W), dtype=jnp.float32)
    weight = (0.02 * jax.random.normal(kw, (D, K), dtype=jnp.float32)
              ).astype(jnp.bfloat16)                          # bf16 MXU operand
    bias = jnp.zeros((1, K), dtype=jnp.float32)

    ema_val = jnp.float32(0.0)
    ema_valid = jnp.asarray(False)

    # Step 1: tight margin -> no sample passes -> loss is NaN, EMA unchanged.
    out1, ent1, loss1, ema_val, ema_valid, reset1 = dct_forward(
        x, weight, bias, jnp.float32(margin_e0), ema_val, ema_valid)
    # Step 2: wide margin -> all samples pass -> loss is the mean entropy.
    # (Same trace as step 1: margin is a runtime scalar, no recompile.)
    out2, ent2, loss2, ema_val, ema_valid, reset2 = dct_forward(
        x, weight, bias, jnp.float32(margin_wide), ema_val, ema_valid)
    jax.block_until_ready((out1, ent1, loss1, out2, ent2, loss2,
                           ema_val, ema_valid, reset1, reset2))

    # Validation against plain-JAX references.
    ref_logits, ref_ent, ref_loss1 = ref_forward(x, weight, bias, margin_e0)
    _, _, ref_loss2 = ref_forward(x, weight, bias, margin_wide)

    assert jnp.allclose(out1, ref_logits, atol=2e-3, rtol=1e-3)
    assert jnp.allclose(out2, ref_logits, atol=2e-3, rtol=1e-3)
    assert jnp.allclose(ent1, ref_ent, atol=1e-2, rtol=1e-3)
    assert jnp.allclose(ent2, ref_ent, atol=1e-2, rtol=1e-3)
    assert bool(jnp.isnan(loss1)) and bool(jnp.isnan(ref_loss1))
    assert jnp.allclose(loss2, ref_loss2, atol=1e-2, rtol=1e-3)
    # EMA: untouched by the NaN loss, then initialised to loss2; no reset.
    assert bool(ema_valid)
    assert jnp.allclose(ema_val, ref_loss2, atol=1e-2, rtol=1e-3)
    assert not bool(reset1) and not bool(reset2)

    print("KERNEL_OK")
</pallas_src>

<mosaic_0001>
module attributes {stable_mosaic.version = 11 : i64} {
  func.func @fused_linear_entropy_kernel(%arg0: i32, %arg1: memref<1xf32, #tpu.memory_space<smem>>, %arg2: memref<1xi32, #tpu.memory_space<smem>>, %arg3: memref<16x1024xf32, #tpu.memory_space<vmem>>, %arg4: memref<1024x128xbf16, #tpu.memory_space<vmem>>, %arg5: memref<1x128xf32, #tpu.memory_space<vmem>>, %arg6: memref<16x128xf32, #tpu.memory_space<vmem>>, %arg7: memref<16x128xf32, #tpu.memory_space<vmem>>, %arg8: memref<1xf32, #tpu.memory_space<smem>>) attributes {dimension_semantics = [#tpu.dimension_semantics<arbitrary>], iteration_bounds = array<i64: 1>, scalar_prefetch = 0 : i64, scratch_operands = 0 : i64, tpu.core_type = #tpu.core_type<tc>, window_params = [{transform_indices = @transform_0, window_bounds = array<i64: 1>}, {transform_indices = @transform_1, window_bounds = array<i64: 1>}, {transform_indices = @transform_2, window_bounds = array<i64: 16, 1024>}, {transform_indices = @transform_3, window_bounds = array<i64: 1024, 128>}, {pipeline_mode = #tpu.pipeline_mode<synchronous>, transform_indices = @transform_4, window_bounds = array<i64: 1, 128>}, {pipeline_mode = #tpu.pipeline_mode<synchronous>, transform_indices = @transform_5, window_bounds = array<i64: 16, 128>}, {pipeline_mode = #tpu.pipeline_mode<synchronous>, transform_indices = @transform_6, window_bounds = array<i64: 16, 128>}, {transform_indices = @transform_7, window_bounds = array<i64: 1>}]} {
    %c0_i32 = arith.constant 0 : i32
    %0 = arith.cmpi eq, %arg0, %c0_i32 : i32
    %1 = arith.extui %0 : i1 to i32
    %c0_i32_0 = arith.constant 0 : i32
    %2 = arith.cmpi ne, %1, %c0_i32_0 : i32
    scf.if %2 {
      %c0_10 = arith.constant 0 : index
      %c0_11 = arith.constant 0 : index
      %13 = vector.load %arg5[%c0_10, %c0_11] : memref<1x128xf32, #tpu.memory_space<vmem>>, vector<1x128xf32>
      %14 = vector.shape_cast %13 : vector<1x128xf32> to vector<1x128xf32>
      %15 = vector.broadcast %14 : vector<1x128xf32> to vector<16x128xf32>
      %c0_12 = arith.constant 0 : index
      %c0_13 = arith.constant 0 : index
      %16 = vector.load %arg6[%c0_12, %c0_13] : memref<16x128xf32, #tpu.memory_space<vmem>>, vector<16x128xf32>
      tpu.vector_store %arg6[%c0_12, %c0_13], %15 {strides = array<i32>} : memref<16x128xf32, #tpu.memory_space<vmem>>, vector<16x128xf32>,
    } else {
    }
    %c0 = arith.constant 0 : index
    %c0_1 = arith.constant 0 : index
    %3 = vector.load %arg6[%c0, %c0_1] : memref<16x128xf32, #tpu.memory_space<vmem>>, vector<16x128xf32>
    %c0_2 = arith.constant 0 : index
    %c0_3 = arith.constant 0 : index
    %4 = vector.load %arg3[%c0_2, %c0_3] : memref<16x1024xf32, #tpu.memory_space<vmem>>, vector<16x1024xf32>
    %5 = arith.truncf %4 : vector<16x1024xf32> to vector<16x1024xbf16>
    %c0_4 = arith.constant 0 : index
    %c0_5 = arith.constant 0 : index
    %6 = vector.load %arg4[%c0_4, %c0_5] : memref<1024x128xbf16, #tpu.memory_space<vmem>>, vector<1024x128xbf16>
    %cst = arith.constant dense<0.000000e+00> : vector<16x128xf32>
    %7 = tpu.matmul %5, %6, %cst {dimension_numbers = #tpu.dot_dimension_numbers<[1], [0], [0], [1], [0, 0, 1, 1], [], []>} : vector<16x1024xbf16>, vector<1024x128xbf16>, vector<16x128xf32> -> vector<16x128xf32>
    %8 = arith.addf %3, %7 : vector<16x128xf32>
    %c0_6 = arith.constant 0 : index
    %c0_7 = arith.constant 0 : index
    %9 = vector.load %arg6[%c0_6, %c0_7] : memref<16x128xf32, #tpu.memory_space<vmem>>, vector<16x128xf32>
    tpu.vector_store %arg6[%c0_6, %c0_7], %8 {strides = array<i32>} : memref<16x128xf32, #tpu.memory_space<vmem>>, vector<16x128xf32>,
    %c0_i32_8 = arith.constant 0 : i32
    %10 = arith.cmpi eq, %arg0, %c0_i32_8 : i32
    %11 = arith.extui %10 : i1 to i32
    %c0_i32_9 = arith.constant 0 : i32
    %12 = arith.cmpi ne, %11, %c0_i32_9 : i32
    scf.if %12 {
      %c0_10 = arith.constant 0 : index
      %c0_11 = arith.constant 0 : index
      %13 = vector.load %arg6[%c0_10, %c0_11] : memref<16x128xf32, #tpu.memory_space<vmem>>, vector<16x128xf32>
      %cst_12 = arith.constant dense<0xFF800000> : vector<16xf32>
      %14 = vector.multi_reduction <maximumf>, %13, %cst_12 [1] : vector<16x128xf32> to vector<16xf32>
      %15 = vector.shape_cast %14 : vector<16xf32> to vector<16x1xf32>
      %16 = vector.broadcast %15 : vector<16x1xf32> to vector<16x128xf32>
      %17 = arith.subf %13, %16 : vector<16x128xf32>
      %18 = math.exp %17 : vector<16x128xf32>
      %cst_13 = arith.constant dense<0.000000e+00> : vector<16xf32>
      %19 = vector.multi_reduction <add>, %18, %cst_13 [1] : vector<16x128xf32> to vector<16xf32>
      %20 = vector.shape_cast %19 : vector<16xf32> to vector<16x1xf32>
      %21 = math.log %20 : vector<16x1xf32>
      %22 = arith.mulf %18, %17 : vector<16x128xf32>
      %cst_14 = arith.constant dense<0.000000e+00> : vector<16xf32>
      %23 = vector.multi_reduction <add>, %22, %cst_14 [1] : vector<16x128xf32> to vector<16xf32>
      %24 = vector.shape_cast %23 : vector<16xf32> to vector<16x1xf32>
      %25 = arith.divf %24, %20 : vector<16x1xf32>
      %26 = arith.subf %21, %25 : vector<16x1xf32>
      %27 = vector.shape_cast %26 : vector<16x1xf32> to vector<16x1xf32>
      %28 = vector.broadcast %27 : vector<16x1xf32> to vector<16x128xf32>
      %c0_15 = arith.constant 0 : index
      %c0_16 = arith.constant 0 : index
      %29 = vector.load %arg7[%c0_15, %c0_16] : memref<16x128xf32, #tpu.memory_space<vmem>>, vector<16x128xf32>
      tpu.vector_store %arg7[%c0_15, %c0_16], %28 {strides = array<i32>} : memref<16x128xf32, #tpu.memory_space<vmem>>, vector<16x128xf32>,
      %30 = tpu.iota {dimensions = array<i32: 0>} : vector<16x1xi32>
      %c0_17 = arith.constant 0 : index
      %31 = memref.load %arg1[%c0_17] : memref<1xf32, #tpu.memory_space<smem>>
      %32 = vector.broadcast %31 : f32 to vector<16x1xf32>
      %33 = arith.cmpf olt, %26, %32 : vector<16x1xf32>
      %c0_18 = arith.constant 0 : index
      %34 = memref.load %arg2[%c0_18] : memref<1xi32, #tpu.memory_space<smem>>
      %35 = vector.broadcast %34 : i32 to vector<16x1xi32>
      %36 = arith.cmpi slt, %30, %35 : vector<16x1xi32>
      %37 = arith.andi %33, %36 : vector<16x1xi1>
      %38 = arith.extui %37 : vector<16x1xi1> to vector<16x1xi32>
      %39 = arith.sitofp %38 : vector<16x1xi32> to vector<16x1xf32>
      %40 = vector.shape_cast %39 : vector<16x1xf32> to vector<1x16x1xf32>
      %cst_19 = arith.constant dense<0.000000e+00> : vector<1xf32>
      %41 = vector.multi_reduction <add>, %40, %cst_19 [1, 2] : vector<1x16x1xf32> to vector<1xf32>
      %42 = vector.shape_cast %41 : vector<1xf32> to vector<1x1x1xf32>
      %43 = vector.extract %42[0, 0, 0] : f32 from vector<1x1x1xf32>
      %cst_20 = arith.constant 0.000000e+00 : f32
      %44 = vector.broadcast %cst_20 : f32 to vector<16x1xf32>
      %45 = arith.select %37, %26, %44 : vector<16x1xi1>, vector<16x1xf32>
      %46 = vector.shape_cast %45 : vector<16x1xf32> to vector<1x16x1xf32>
      %cst_21 = arith.constant dense<0.000000e+00> : vector<1xf32>
      %47 = vector.multi_reduction <add>, %46, %cst_21 [1, 2] : vector<1x16x1xf32> to vector<1xf32>
      %48 = vector.shape_cast %47 : vector<1xf32> to vector<1x1x1xf32>
      %49 = vector.extract %48[0, 0, 0] : f32 from vector<1x1x1xf32>
      %50 = arith.divf %49, %43 : f32
      %c0_22 = arith.constant 0 : index
      %51 = memref.load %arg8[%c0_22] : memref<1xf32, #tpu.memory_space<smem>>
      memref.store %50, %arg8[%c0_22] : memref<1xf32, #tpu.memory_space<smem>>
    } else {
    }
    return
  }
  func.func @transform_0(%arg0: i32) -> i32 {
    %c0_i32 = arith.constant 0 : i32
    %c0_i32_0 = arith.constant 0 : i32
    return %c0_i32 : i32
  }
  func.func @transform_1(%arg0: i32) -> i32 {
    %c0_i32 = arith.constant 0 : i32
    %c0_i32_0 = arith.constant 0 : i32
    return %c0_i32 : i32
  }
  func.func @transform_2(%arg0: i32) -> (i32, i32) {
    %c0_i32 = arith.constant 0 : i32
    %c0_i32_0 = arith.constant 0 : i32
    return %c0_i32, %arg0 : i32, i32
  }
  func.func @transform_3(%arg0: i32) -> (i32, i32) {
    %c0_i32 = arith.constant 0 : i32
    %c0_i32_0 = arith.constant 0 : i32
    return %arg0, %c0_i32 : i32, i32
  }
  func.func @transform_4(%arg0: i32) -> (i32, i32) {
    %c0_i32 = arith.constant 0 : i32
    %c0_i32_0 = arith.constant 0 : i32
    %c0_i32_1 = arith.constant 0 : i32
    return %c0_i32, %c0_i32_0 : i32, i32
  }
  func.func @transform_5(%arg0: i32) -> (i32, i32) {
    %c0_i32 = arith.constant 0 : i32
    %c0_i32_0 = arith.constant 0 : i32
    %c0_i32_1 = arith.constant 0 : i32
    return %c0_i32, %c0_i32_0 : i32, i32
  }
  func.func @transform_6(%arg0: i32) -> (i32, i32) {
    %c0_i32 = arith.constant 0 : i32
    %c0_i32_0 = arith.constant 0 : i32
    %c0_i32_1 = arith.constant 0 : i32
    return %c0_i32, %c0_i32_0 : i32, i32
  }
  func.func @transform_7(%arg0: i32) -> i32 {
    %c0_i32 = arith.constant 0 : i32
    %c0_i32_0 = arith.constant 0 : i32
    return %c0_i32 : i32
  }
}

</mosaic_0001>

<llo_original>
// kernel: dct_forward.1
$region0: #{dct_forward.1}
  #allocation0 [shape = 'u32[]', space=smem, size = 0x4, offset = 0x4, fixed_abs, tag = 'smem constant byte address 0x4 - core index']
  #allocation1 [shape = 'u32[72,128]{1,0:T(1,128)}', space=vmem, size = 0x9000, scoped, tag = 'internal scratch']
  #allocation2 [shape = 'f32[1]{0:T(128)S(6)}', space=smem, size = 0x200, scoped, tag = 'scoped memory for dct_forward.1']
  #allocation3 [shape = 's32[1]{0:T(128)S(6)}', space=smem, size = 0x200, scoped, tag = 'scoped memory for dct_forward.1']
  %s0 = inlined_call_operand.<no memory space> [shape: f32[1], index: 0, kind: input, shape index: {}]
  %s1 = inlined_call_operand.<no memory space> [shape: s32[1], index: 1, kind: input, shape index: {}]
  %s2 = inlined_call_operand.vmem [shape: f32[16,1024], index: 2, kind: input, shape index: {}]
  %s3 = inlined_call_operand.vmem [shape: bf16[1024,128], index: 3, kind: input, shape index: {}]
  %s4 = inlined_call_operand.vmem [shape: f32[1,128], index: 4, kind: input, shape index: {}]
  %s5 = inlined_call_operand.vmem [shape: f32[16,128], index: 5, kind: output, shape index: {0}]
  %s6 = inlined_call_operand.vmem [shape: f32[16,128], index: 6, kind: output, shape index: {1}]
  %s7 = inlined_call_operand.hbm [shape: f32[1], index: 7, kind: output, shape index: {2}]
  %8 = xla_tuple %s5, %s6, %s7
  %s9 = sld [smem:[#allocation0]]
  $region54: #{dct_forward.1} parent=0
    _
  %s11 = ssub.s32 1, %s9
  %s12 = scalar_select 0, %s11, %s9
  %13 = sst [smem:[#allocation2]] %s0
  %14 = sst [smem:[#allocation3]] %s1
  $region1: #{dct_forward.1} parent=0
    #allocation4 [shape = 'u8[512]{0}', space=smem, size = 0x200, scoped, tag = 'output window, operand 2, single buffered']
    #allocation5 [shape = 's32[1]{0}', space=sflag, size = 0x4, scoped, tag = 'scoped memory for dct_forward.1']
    %15 = vsyncpa [#allocation5], 0
    // Predicated region
    $region2: #{dct_forward.1} parent=1 // pred_check
      _
    $region3: #{dct_forward.1} parent=1 // pred_check_branch
      %17 = sbr.rel (0) target = $region5
    $region4: #{dct_forward.1} parent=1 // pred_region
      _
    $region5: #{dct_forward.1} parent=1 // pred_fallthru
      _
    // Predicated region
    $region6: #{dct_forward.1} parent=1 // pred_check
      _
    $region7: #{dct_forward.1} parent=1 // pred_check_branch
      %19 = sbr.rel (0) target = $region9
    $region8: #{dct_forward.1} parent=1 // pred_region
      _
    $region9: #{dct_forward.1} parent=1 // pred_fallthru
      _
    // Predicated region
    $region10: #{dct_forward.1} parent=1 // pred_check
      _
    $region11: #{dct_forward.1} parent=1 // pred_check_branch
      %21 = sbr.rel (0) target = $region13
    $region12: #{dct_forward.1} parent=1 // pred_region
      _
    $region13: #{dct_forward.1} parent=1 // pred_fallthru
      _
    // Predicated region
    $region14: #{dct_forward.1} parent=1 // pred_check
      _
    $region15: #{dct_forward.1} parent=1 // pred_check_branch
      %23 = sbr.rel (0) target = $region17
    $region16: #{dct_forward.1} parent=1 // pred_region
      _
    $region17: #{dct_forward.1} parent=1 // pred_fallthru
      _
    // Predicated region
    $region18: #{dct_forward.1} parent=1 // pred_check
      _
    $region19: #{dct_forward.1} parent=1 // pred_check_branch
      %25 = sbr.rel (0) target = $region21
    $region20: #{dct_forward.1} parent=1 // pred_region
      _
    $region21: #{dct_forward.1} parent=1 // pred_fallthru
      _
    %p26 = scmp.eq.s32.totalorder 0, 0
    // Predicated region
    $region22: #{dct_forward.1} parent=1 // pred_check
      %p27 = pneg %p26
    $region23: #{dct_forward.1} parent=1 // pred_check_branch
      %29 = sbr.rel (%p27) target = $region25
    $region24: #{dct_forward.1} parent=1 // pred_region
      %v30 = vld [vmem:[%s4] sm:$0x1]
      %v32 = vperm.slane %v30, 0
      %34 = vst [vmem:[%s5] sm:$0xff] %v32
      %35 = vst [vmem:[%s5 + $0x8] sm:$0xff] %v32
    $region25: #{dct_forward.1} parent=1 // pred_fallthru
      _
    %v36 = vld [vmem:[%s5] sm:$0xff]
    %v37 = vld [vmem:[%s5 + $0x8] sm:$0xff]
    %v38 = vld [vmem:[%s2] sm:$0xff]
    %v39 = vld [vmem:[%s2 + $0x8] sm:$0xff]
    %v40 = vld [vmem:[%s2 + $0x10] sm:$0xff]
    %v41 = vld [vmem:[%s2 + $0x18] sm:$0xff]
    %v42 = vld [vmem:[%s2 + $0x20] sm:$0xff]
    %v43 = vld [vmem:[%s2 + $0x28] sm:$0xff]
    %v44 = vld [vmem:[%s2 + $0x30] sm:$0xff]
    %v45 = vld [vmem:[%s2 + $0x38] sm:$0xff]
    %v46 = vld [vmem:[%s2 + $0x40] sm:$0xff]
    %v47 = vld [vmem:[%s2 + $0x48] sm:$0xff]
    %v48 = vld [vmem:[%s2 + $0x50] sm:$0xff]
    %v49 = vld [vmem:[%s2 + $0x58] sm:$0xff]
    %v50 = vld [vmem:[%s2 + $0x60] sm:$0xff]
    %v51 = vld [vmem:[%s2 + $0x68] sm:$0xff]
    %v52 = vld [vmem:[%s2 + $0x70] sm:$0xff]
    %v53 = vld [vmem:[%s2 + $0x78] sm:$0xff]
    %v54 = vpack.c.bf16 %v46, %v38
    %v55 = vpack.c.bf16 %v47, %v39
    %v56 = vpack.c.bf16 %v48, %v40
    %v57 = vpack.c.bf16 %v49, %v41
    %v58 = vpack.c.bf16 %v50, %v42
    %v59 = vpack.c.bf16 %v51, %v43
    %v60 = vpack.c.bf16 %v52, %v44
    %v61 = vpack.c.bf16 %v53, %v45
    %v62 = vld [vmem:[%s3] sm:$0xf]
    %v63 = vld [vmem:[%s3 + $0x4] sm:$0xf]
    %v64 = vld [vmem:[%s3 + $0x8] sm:$0xf]
    %v65 = vld [vmem:[%s3 + $0xc] sm:$0xf]
    %v66 = vld [vmem:[%s3 + $0x10] sm:$0xf]
    %v67 = vld [vmem:[%s3 + $0x14] sm:$0xf]
    %v68 = vld [vmem:[%s3 + $0x18] sm:$0xf]
    %v69 = vld [vmem:[%s3 + $0x1c] sm:$0xf]
    %v70 = vld [vmem:[%s3 + $0x20] sm:$0xf]
    %v71 = vld [vmem:[%s3 + $0x24] sm:$0xf]
    %v72 = vld [vmem:[%s3 + $0x28] sm:$0xf]
    %v73 = vld [vmem:[%s3 + $0x2c] sm:$0xf]
    %v74 = vld [vmem:[%s3 + $0x30] sm:$0xf]
    %v75 = vld [vmem:[%s3 + $0x34] sm:$0xf]
    %v76 = vld [vmem:[%s3 + $0x38] sm:$0xf]
    %v77 = vld [vmem:[%s3 + $0x3c] sm:$0xf]
    %v78 = vld [vmem:[%s3 + $0x40] sm:$0xf]
    %v79 = vld [vmem:[%s3 + $0x44] sm:$0xf]
    %v80 = vld [vmem:[%s3 + $0x48] sm:$0xf]
    %v81 = vld [vmem:[%s3 + $0x4c] sm:$0xf]
    %v82 = vld [vmem:[%s3 + $0x50] sm:$0xf]
    %v83 = vld [vmem:[%s3 + $0x54] sm:$0xf]
    %v84 = vld [vmem:[%s3 + $0x58] sm:$0xf]
    %v85 = vld [vmem:[%s3 + $0x5c] sm:$0xf]
    %v86 = vld [vmem:[%s3 + $0x60] sm:$0xf]
    %v87 = vld [vmem:[%s3 + $0x64] sm:$0xf]
    %v88 = vld [vmem:[%s3 + $0x68] sm:$0xf]
    %v89 = vld [vmem:[%s3 + $0x6c] sm:$0xf]
    %v90 = vld [vmem:[%s3 + $0x70] sm:$0xf]
    %v91 = vld [vmem:[%s3 + $0x74] sm:$0xf]
    %v92 = vld [vmem:[%s3 + $0x78] sm:$0xf]
    %v93 = vld [vmem:[%s3 + $0x7c] sm:$0xf]
    %v94 = vld [vmem:[%s3 + $0x80] sm:$0xf]
    %v95 = vld [vmem:[%s3 + $0x84] sm:$0xf]
    %v96 = vld [vmem:[%s3 + $0x88] sm:$0xf]
    %v97 = vld [vmem:[%s3 + $0x8c] sm:$0xf]
    %v98 = vld [vmem:[%s3 + $0x90] sm:$0xf]
    %v99 = vld [vmem:[%s3 + $0x94] sm:$0xf]
    %v100 = vld [vmem:[%s3 + $0x98] sm:$0xf]
    %v101 = vld [vmem:[%s3 + $0x9c] sm:$0xf]
    %v102 = vld [vmem:[%s3 + $0xa0] sm:$0xf]
    %v103 = vld [vmem:[%s3 + $0xa4] sm:$0xf]
    %v104 = vld [vmem:[%s3 + $0xa8] sm:$0xf]
    %v105 = vld [vmem:[%s3 + $0xac] sm:$0xf]
    %v106 = vld [vmem:[%s3 + $0xb0] sm:$0xf]
    %v107 = vld [vmem:[%s3 + $0xb4] sm:$0xf]
    %v108 = vld [vmem:[%s3 + $0xb8] sm:$0xf]
    %v109 = vld [vmem:[%s3 + $0xbc] sm:$0xf]
    %v110 = vld [vmem:[%s3 + $0xc0] sm:$0xf]
    %v111 = vld [vmem:[%s3 + $0xc4] sm:$0xf]
    %v112 = vld [vmem:[%s3 + $0xc8] sm:$0xf]
    %v113 = vld [vmem:[%s3 + $0xcc] sm:$0xf]
    %v114 = vld [vmem:[%s3 + $0xd0] sm:$0xf]
    %v115 = vld [vmem:[%s3 + $0xd4] sm:$0xf]
    %v116 = vld [vmem:[%s3 + $0xd8] sm:$0xf]
    %v117 = vld [vmem:[%s3 + $0xdc] sm:$0xf]
    %v118 = vld [vmem:[%s3 + $0xe0] sm:$0xf]
    %v119 = vld [vmem:[%s3 + $0xe4] sm:$0xf]
    %v120 = vld [vmem:[%s3 + $0xe8] sm:$0xf]
    %v121 = vld [vmem:[%s3 + $0xec] sm:$0xf]
    %v122 = vld [vmem:[%s3 + $0xf0] sm:$0xf]
    %v123 = vld [vmem:[%s3 + $0xf4] sm:$0xf]
    %v124 = vld [vmem:[%s3 + $0xf8] sm:$0xf]
    %v125 = vld [vmem:[%s3 + $0xfc] sm:$0xf]
    %v126 = vld [vmem:[%s3 + $0x100] sm:$0xf]
    %v127 = vld [vmem:[%s3 + $0x104] sm:$0xf]
    %v128 = vld [vmem:[%s3 + $0x108] sm:$0xf]
    %v129 = vld [vmem:[%s3 + $0x10c] sm:$0xf]
    %v130 = vld [vmem:[%s3 + $0x110] sm:$0xf]
    %v131 = vld [vmem:[%s3 + $0x114] sm:$0xf]
    %v132 = vld [vmem:[%s3 + $0x118] sm:$0xf]
    %v133 = vld [vmem:[%s3 + $0x11c] sm:$0xf]
    %v134 = vld [vmem:[%s3 + $0x120] sm:$0xf]
    %v135 = vld [vmem:[%s3 + $0x124] sm:$0xf]
    %v136 = vld [vmem:[%s3 + $0x128] sm:$0xf]
    %v137 = vld [vmem:[%s3 + $0x12c] sm:$0xf]
    %v138 = vld [vmem:[%s3 + $0x130] sm:$0xf]
    %v139 = vld [vmem:[%s3 + $0x134] sm:$0xf]
    %v140 = vld [vmem:[%s3 + $0x138] sm:$0xf]
    %v141 = vld [vmem:[%s3 + $0x13c] sm:$0xf]
    %v142 = vld [vmem:[%s3 + $0x140] sm:$0xf]
    %v143 = vld [vmem:[%s3 + $0x144] sm:$0xf]
    %v144 = vld [vmem:[%s3 + $0x148] sm:$0xf]
    %v145 = vld [vmem:[%s3 + $0x14c] sm:$0xf]
    %v146 = vld [vmem:[%s3 + $0x150] sm:$0xf]
    %v147 = vld [vmem:[%s3 + $0x154] sm:$0xf]
    %v148 = vld [vmem:[%s3 + $0x158] sm:$0xf]
    %v149 = vld [vmem:[%s3 + $0x15c] sm:$0xf]
    %v150 = vld [vmem:[%s3 + $0x160] sm:$0xf]
    %v151 = vld [vmem:[%s3 + $0x164] sm:$0xf]
    %v152 = vld [vmem:[%s3 + $0x168] sm:$0xf]
    %v153 = vld [vmem:[%s3 + $0x16c] sm:$0xf]
    %v154 = vld [vmem:[%s3 + $0x170] sm:$0xf]
    %v155 = vld [vmem:[%s3 + $0x174] sm:$0xf]
    %v156 = vld [vmem:[%s3 + $0x178] sm:$0xf]
    %v157 = vld [vmem:[%s3 + $0x17c] sm:$0xf]
    %v158 = vld [vmem:[%s3 + $0x180] sm:$0xf]
    %v159 = vld [vmem:[%s3 + $0x184] sm:$0xf]
    %v160 = vld [vmem:[%s3 + $0x188] sm:$0xf]
    %v161 = vld [vmem:[%s3 + $0x18c] sm:$0xf]
    %v162 = vld [vmem:[%s3 + $0x190] sm:$0xf]
    %v163 = vld [vmem:[%s3 + $0x194] sm:$0xf]
    %v164 = vld [vmem:[%s3 + $0x198] sm:$0xf]
    %v165 = vld [vmem:[%s3 + $0x19c] sm:$0xf]
    %v166 = vld [vmem:[%s3 + $0x1a0] sm:$0xf]
    %v167 = vld [vmem:[%s3 + $0x1a4] sm:$0xf]
    %v168 = vld [vmem:[%s3 + $0x1a8] sm:$0xf]
    %v169 = vld [vmem:[%s3 + $0x1ac] sm:$0xf]
    %v170 = vld [vmem:[%s3 + $0x1b0] sm:$0xf]
    %v171 = vld [vmem:[%s3 + $0x1b4] sm:$0xf]
    %v172 = vld [vmem:[%s3 + $0x1b8] sm:$0xf]
    %v173 = vld [vmem:[%s3 + $0x1bc] sm:$0xf]
    %v174 = vld [vmem:[%s3 + $0x1c0] sm:$0xf]
    %v175 = vld [vmem:[%s3 + $0x1c4] sm:$0xf]
    %v176 = vld [vmem:[%s3 + $0x1c8] sm:$0xf]
    %v177 = vld [vmem:[%s3 + $0x1cc] sm:$0xf]
    %v178 = vld [vmem:[%s3 + $0x1d0] sm:$0xf]
    %v179 = vld [vmem:[%s3 + $0x1d4] sm:$0xf]
    %v180 = vld [vmem:[%s3 + $0x1d8] sm:$0xf]
    %v181 = vld [vmem:[%s3 + $0x1dc] sm:$0xf]
    %v182 = vld [vmem:[%s3 + $0x1e0] sm:$0xf]
    %v183 = vld [vmem:[%s3 + $0x1e4] sm:$0xf]
    %v184 = vld [vmem:[%s3 + $0x1e8] sm:$0xf]
    %v185 = vld [vmem:[%s3 + $0x1ec] sm:$0xf]
    %v186 = vld [vmem:[%s3 + $0x1f0] sm:$0xf]
    %v187 = vld [vmem:[%s3 + $0x1f4] sm:$0xf]
    %v188 = vld [vmem:[%s3 + $0x1f8] sm:$0xf]
    %v189 = vld [vmem:[%s3 + $0x1fc] sm:$0xf]
    %v318 = vunpack.c.l.b16 %v62
    %v319 = vunpack.c.l.b16 %v63
    %v320 = vunpack.c.l.b16 %v64
    %v321 = vunpack.c.l.b16 %v65
    %v322 = vunpack.c.l.b16 %v66
    %v323 = vunpack.c.l.b16 %v67
    %v324 = vunpack.c.l.b16 %v68
    %v325 = vunpack.c.l.b16 %v69
    %v326 = vunpack.c.l.b16 %v70
    %v327 = vunpack.c.l.b16 %v71
    %v328 = vunpack.c.l.b16 %v72
    %v329 = vunpack.c.l.b16 %v73
    %v330 = vunpack.c.l.b16 %v74
    %v331 = vunpack.c.l.b16 %v75
    %v332 = vunpack.c.l.b16 %v76
    %v333 = vunpack.c.l.b16 %v77
    %v334 = vunpack.c.l.b16 %v78
    %v335 = vunpack.c.l.b16 %v79
    %v336 = vunpack.c.l.b16 %v80
    %v337 = vunpack.c.l.b16 %v81
    %v338 = vunpack.c.l.b16 %v82
    %v339 = vunpack.c.l.b16 %v83
    %v340 = vunpack.c.l.b16 %v84
    %v341 = vunpack.c.l.b16 %v85
    %v342 = vunpack.c.l.b16 %v86
    %v343 = vunpack.c.l.b16 %v87
    %v344 = vunpack.c.l.b16 %v88
    %v345 = vunpack.c.l.b16 %v89
    %v346 = vunpack.c.l.b16 %v90
    %v347 = vunpack.c.l.b16 %v91
    %v348 = vunpack.c.l.b16 %v92
    %v349 = vunpack.c.l.b16 %v93
    %v350 = vunpack.c.l.b16 %v94
    %v351 = vunpack.c.l.b16 %v95
    %v352 = vunpack.c.l.b16 %v96
    %v353 = vunpack.c.l.b16 %v97
    %v354 = vunpack.c.l.b16 %v98
    %v355 = vunpack.c.l.b16 %v99
    %v356 = vunpack.c.l.b16 %v100
    %v357 = vunpack.c.l.b16 %v101
    %v358 = vunpack.c.l.b16 %v102
    %v359 = vunpack.c.l.b16 %v103
    %v360 = vunpack.c.l.b16 %v104
    %v361 = vunpack.c.l.b16 %v105
    %v362 = vunpack.c.l.b16 %v106
    %v363 = vunpack.c.l.b16 %v107
    %v364 = vunpack.c.l.b16 %v108
    %v365 = vunpack.c.l.b16 %v109
    %v366 = vunpack.c.l.b16 %v110
    %v367 = vunpack.c.l.b16 %v111
    %v368 = vunpack.c.l.b16 %v112
    %v369 = vunpack.c.l.b16 %v113
    %v370 = vunpack.c.l.b16 %v114
    %v371 = vunpack.c.l.b16 %v115
    %v372 = vunpack.c.l.b16 %v116
    %v373 = vunpack.c.l.b16 %v117
    %v374 = vunpack.c.l.b16 %v118
    %v375 = vunpack.c.l.b16 %v119
    %v376 = vunpack.c.l.b16 %v120
    %v377 = vunpack.c.l.b16 %v121
    %v378 = vunpack.c.l.b16 %v122
    %v379 = vunpack.c.l.b16 %v123
    %v380 = vunpack.c.l.b16 %v124
    %v381 = vunpack.c.l.b16 %v125
    %v382 = vunpack.c.l.b16 %v126
    %v383 = vunpack.c.l.b16 %v127
    %v384 = vunpack.c.l.b16 %v128
    %v385 = vunpack.c.l.b16 %v129
    %v386 = vunpack.c.l.b16 %v130
    %v387 = vunpack.c.l.b16 %v131
    %v388 = vunpack.c.l.b16 %v132
    %v389 = vunpack.c.l.b16 %v133
    %v390 = vunpack.c.l.b16 %v134
    %v391 = vunpack.c.l.b16 %v135
    %v392 = vunpack.c.l.b16 %v136
    %v393 = vunpack.c.l.b16 %v137
    %v394 = vunpack.c.l.b16 %v138
    %v395 = vunpack.c.l.b16 %v139
    %v396 = vunpack.c.l.b16 %v140
    %v397 = vunpack.c.l.b16 %v141
    %v398 = vunpack.c.l.b16 %v142
    %v399 = vunpack.c.l.b16 %v143
    %v400 = vunpack.c.l.b16 %v144
    %v401 = vunpack.c.l.b16 %v145
    %v402 = vunpack.c.l.b16 %v146
    %v403 = vunpack.c.l.b16 %v147
    %v404 = vunpack.c.l.b16 %v148
    %v405 = vunpack.c.l.b16 %v149
    %v406 = vunpack.c.l.b16 %v150
    %v407 = vunpack.c.l.b16 %v151
    %v408 = vunpack.c.l.b16 %v152
    %v409 = vunpack.c.l.b16 %v153
    %v410 = vunpack.c.l.b16 %v154
    %v411 = vunpack.c.l.b16 %v155
    %v412 = vunpack.c.l.b16 %v156
    %v413 = vunpack.c.l.b16 %v157
    %v414 = vunpack.c.l.b16 %v158
    %v415 = vunpack.c.l.b16 %v159
    %v416 = vunpack.c.l.b16 %v160
    %v417 = vunpack.c.l.b16 %v161
    %v418 = vunpack.c.l.b16 %v162
    %v419 = vunpack.c.l.b16 %v163
    %v420 = vunpack.c.l.b16 %v164
    %v421 = vunpack.c.l.b16 %v165
    %v422 = vunpack.c.l.b16 %v166
    %v423 = vunpack.c.l.b16 %v167
    %v424 = vunpack.c.l.b16 %v168
    %v425 = vunpack.c.l.b16 %v169
    %v426 = vunpack.c.l.b16 %v170
    %v427 = vunpack.c.l.b16 %v171
    %v428 = vunpack.c.l.b16 %v172
    %v429 = vunpack.c.l.b16 %v173
    %v430 = vunpack.c.l.b16 %v174
    %v431 = vunpack.c.l.b16 %v175
    %v432 = vunpack.c.l.b16 %v176
    %v433 = vunpack.c.l.b16 %v177
    %v434 = vunpack.c.l.b16 %v178
    %v435 = vunpack.c.l.b16 %v179
    %v436 = vunpack.c.l.b16 %v180
    %v437 = vunpack.c.l.b16 %v181
    %v438 = vunpack.c.l.b16 %v182
    %v439 = vunpack.c.l.b16 %v183
    %v440 = vunpack.c.l.b16 %v184
    %v441 = vunpack.c.l.b16 %v185
    %v442 = vunpack.c.l.b16 %v186
    %v443 = vunpack.c.l.b16 %v187
    %v444 = vunpack.c.l.b16 %v188
    %v445 = vunpack.c.l.b16 %v189
    %v446 = vpack.c.b16 %v319, %v318
    %v447 = vpack.c.b16 %v321, %v320
    %v448 = vpack.c.b16 %v323, %v322
    %v449 = vpack.c.b16 %v325, %v324
    %v450 = vpack.c.b16 %v327, %v326
    %v451 = vpack.c.b16 %v329, %v328
    %v452 = vpack.c.b16 %v331, %v330
    %v453 = vpack.c.b16 %v333, %v332
    %v454 = vpack.c.b16 %v335, %v334
    %v455 = vpack.c.b16 %v337, %v336
    %v456 = vpack.c.b16 %v339, %v338
    %v457 = vpack.c.b16 %v341, %v340
    %v458 = vpack.c.b16 %v343, %v342
    %v459 = vpack.c.b16 %v345, %v344
    %v460 = vpack.c.b16 %v347, %v346
    %v461 = vpack.c.b16 %v349, %v348
    %v462 = vpack.c.b16 %v351, %v350
    %v463 = vpack.c.b16 %v353, %v352
    %v464 = vpack.c.b16 %v355, %v354
    %v465 = vpack.c.b16 %v357, %v356
    %v466 = vpack.c.b16 %v359, %v358
    %v467 = vpack.c.b16 %v361, %v360
    %v468 = vpack.c.b16 %v363, %v362
    %v469 = vpack.c.b16 %v365, %v364
    %v470 = vpack.c.b16 %v367, %v366
    %v471 = vpack.c.b16 %v369, %v368
    %v472 = vpack.c.b16 %v371, %v370
    %v473 = vpack.c.b16 %v373, %v372
    %v474 = vpack.c.b16 %v375, %v374
    %v475 = vpack.c.b16 %v377, %v376
    %v476 = vpack.c.b16 %v379, %v378
    %v477 = vpack.c.b16 %v381, %v380
    %v478 = vpack.c.b16 %v383, %v382
    %v479 = vpack.c.b16 %v385, %v384
    %v480 = vpack.c.b16 %v387, %v386
    %v481 = vpack.c.b16 %v389, %v388
    %v482 = vpack.c.b16 %v391, %v390
    %v483 = vpack.c.b16 %v393, %v392
    %v484 = vpack.c.b16 %v395, %v394
    %v485 = vpack.c.b16 %v397, %v396
    %v486 = vpack.c.b16 %v399, %v398
    %v487 = vpack.c.b16 %v401, %v400
    %v488 = vpack.c.b16 %v403, %v402
    %v489 = vpack.c.b16 %v405, %v404
    %v490 = vpack.c.b16 %v407, %v406
    %v491 = vpack.c.b16 %v409, %v408
    %v492 = vpack.c.b16 %v411, %v410
    %v493 = vpack.c.b16 %v413, %v412
    %v494 = vpack.c.b16 %v415, %v414
    %v495 = vpack.c.b16 %v417, %v416
    %v496 = vpack.c.b16 %v419, %v418
    %v497 = vpack.c.b16 %v421, %v420
    %v498 = vpack.c.b16 %v423, %v422
    %v499 = vpack.c.b16 %v425, %v424
    %v500 = vpack.c.b16 %v427, %v426
    %v501 = vpack.c.b16 %v429, %v428
    %v502 = vpack.c.b16 %v431, %v430
    %v503 = vpack.c.b16 %v433, %v432
    %v504 = vpack.c.b16 %v435, %v434
    %v505 = vpack.c.b16 %v437, %v436
    %v506 = vpack.c.b16 %v439, %v438
    %v507 = vpack.c.b16 %v441, %v440
    %v508 = vpack.c.b16 %v443, %v442
    %v509 = vpack.c.b16 %v445, %v444
    %574 = vmatpush.bf16.msra.mxu0 %v453
    %575 = vmatpush.bf16.msra.mxu0 %v452
    %576 = vmatpush.bf16.msra.mxu0 %v451
    %577 = vmatpush.bf16.msra.mxu0 %v450
    %578 = vmatpush.bf16.msra.mxu0 %v449
    %579 = vmatpush.bf16.msra.mxu0 %v448
    %580 = vmatpush.bf16.msra.mxu0 %v447
    %581 = vmatpush.bf16.msra.mxu0 %v446
    %582 = vmatmul.bf16.gmra.mxu0 %v54
    %v583 = vpop.f32.mrf.mxu0
    %v584 = vadd.f32 0.0, %v583
    %v585 = vpop.f32.mrf.mxu0
    %v586 = vadd.f32 0.0, %v585
    %587 = vdwg.mxu0
    %588 = vmatpush.bf16.msra.mxu0 %v461
    %589 = vmatpush.bf16.msra.mxu0 %v460
    %590 = vmatpush.bf16.msra.mxu0 %v459
    %591 = vmatpush.bf16.msra.mxu0 %v458
    %592 = vmatpush.bf16.msra.mxu0 %v457
    %593 = vmatpush.bf16.msra.mxu0 %v456
    %594 = vmatpush.bf16.msra.mxu0 %v455
    %595 = vmatpush.bf16.msra.mxu0 %v454
    %596 = vmatmul.bf16.gmra.mxu0 %v55
    %v597 = vpop.f32.mrf.mxu0
    %v598 = vadd.f32 %v584, %v597
    %v599 = vpop.f32.mrf.mxu0
    %v600 = vadd.f32 %v586, %v599
    %601 = vdwg.mxu0
    %602 = vmatpush.bf16.msra.mxu0 %v469
    %603 = vmatpush.bf16.msra.mxu0 %v468
    %604 = vmatpush.bf16.msra.mxu0 %v467
    %605 = vmatpush.bf16.msra.mxu0 %v466
    %606 = vmatpush.bf16.msra.mxu0 %v465
    %607 = vmatpush.bf16.msra.mxu0 %v464
    %608 = vmatpush.bf16.msra.mxu0 %v463
    %609 = vmatpush.bf16.msra.mxu0 %v462
    %610 = vmatmul.bf16.gmra.mxu0 %v56
    %v611 = vpop.f32.mrf.mxu0
    %v612 = vadd.f32 %v598, %v611
    %v613 = vpop.f32.mrf.mxu0
    %v614 = vadd.f32 %v600, %v613
    %615 = vdwg.mxu0
    %616 = vmatpush.bf16.msra.mxu0 %v477
    %617 = vmatpush.bf16.msra.mxu0 %v476
    %618 = vmatpush.bf16.msra.mxu0 %v475
    %619 = vmatpush.bf16.msra.mxu0 %v474
    %620 = vmatpush.bf16.msra.mxu0 %v473
    %621 = vmatpush.bf16.msra.mxu0 %v472
    %622 = vmatpush.bf16.msra.mxu0 %v471
    %623 = vmatpush.bf16.msra.mxu0 %v470
    %624 = vmatmul.bf16.gmra.mxu0 %v57
    %v625 = vpop.f32.mrf.mxu0
    %v626 = vadd.f32 %v612, %v625
    %v627 = vpop.f32.mrf.mxu0
    %v628 = vadd.f32 %v614, %v627
    %629 = vdwg.mxu0
    %630 = vmatpush.bf16.msra.mxu0 %v485
    %631 = vmatpush.bf16.msra.mxu0 %v484
    %632 = vmatpush.bf16.msra.mxu0 %v483
    %633 = vmatpush.bf16.msra.mxu0 %v482
    %634 = vmatpush.bf16.msra.mxu0 %v481
    %635 = vmatpush.bf16.msra.mxu0 %v480
    %636 = vmatpush.bf16.msra.mxu0 %v479
    %637 = vmatpush.bf16.msra.mxu0 %v478
    %638 = vmatmul.bf16.gmra.mxu0 %v58
    %v639 = vpop.f32.mrf.mxu0
    %v640 = vadd.f32 %v626, %v639
    %v641 = vpop.f32.mrf.mxu0
    %v642 = vadd.f32 %v628, %v641
    %643 = vdwg.mxu0
    %644 = vmatpush.bf16.msra.mxu0 %v493
    %645 = vmatpush.bf16.msra.mxu0 %v492
    %646 = vmatpush.bf16.msra.mxu0 %v491
    %647 = vmatpush.bf16.msra.mxu0 %v490
    %648 = vmatpush.bf16.msra.mxu0 %v489
    %649 = vmatpush.bf16.msra.mxu0 %v488
    %650 = vmatpush.bf16.msra.mxu0 %v487
    %651 = vmatpush.bf16.msra.mxu0 %v486
    %652 = vmatmul.bf16.gmra.mxu0 %v59
    %v653 = vpop.f32.mrf.mxu0
    %v654 = vadd.f32 %v640, %v653
    %v655 = vpop.f32.mrf.mxu0
    %v656 = vadd.f32 %v642, %v655
    %657 = vdwg.mxu0
    %658 = vmatpush.bf16.msra.mxu0 %v501
    %659 = vmatpush.bf16.msra.mxu0 %v500
    %660 = vmatpush.bf16.msra.mxu0 %v499
    %661 = vmatpush.bf16.msra.mxu0 %v498
    %662 = vmatpush.bf16.msra.mxu0 %v497
    %663 = vmatpush.bf16.msra.mxu0 %v496
    %664 = vmatpush.bf16.msra.mxu0 %v495
    %665 = vmatpush.bf16.msra.mxu0 %v494
    %666 = vmatmul.bf16.gmra.mxu0 %v60
    %v667 = vpop.f32.mrf.mxu0
    %v668 = vadd.f32 %v654, %v667
    %v669 = vpop.f32.mrf.mxu0
    %v670 = vadd.f32 %v656, %v669
    %671 = vdwg.mxu0
    %672 = vmatpush.bf16.msra.mxu0 %v509
    %673 = vmatpush.bf16.msra.mxu0 %v508
    %674 = vmatpush.bf16.msra.mxu0 %v507
    %675 = vmatpush.bf16.msra.mxu0 %v506
    %676 = vmatpush.bf16.msra.mxu0 %v505
    %677 = vmatpush.bf16.msra.mxu0 %v504
    %678 = vmatpush.bf16.msra.mxu0 %v503
    %679 = vmatpush.bf16.msra.mxu0 %v502
    %680 = vmatmul.bf16.gmra.mxu0 %v61
    %v681 = vpop.f32.mrf.mxu0
    %v682 = vadd.f32 %v668, %v681
    %v683 = vpop.f32.mrf.mxu0
    %v684 = vadd.f32 %v670, %v683
    %685 = vdwg.mxu0
    %v686 = vadd.f32 %v36, %v682
    %v687 = vadd.f32 %v37, %v684
    %688 = vst [vmem:[%s5] sm:$0xff] %v686
    %689 = vst [vmem:[%s5 + $0x8] sm:$0xff] %v687
    // Predicated region
    $region26: #{dct_forward.1} parent=1 // pred_check
      %p690 = pneg %p26
    $region27: #{dct_forward.1} parent=1 // pred_check_branch
      %692 = sbr.rel (%p690) target = $region29
    $region28: #{dct_forward.1} parent=1 // pred_region
      %v693 = vld [vmem:[%s5] sm:$0xff]
      %v694 = vld [vmem:[%s5 + $0x8] sm:$0xff]
      %695 = vmax.xlane.f32.xlu0 %v693
      %v696 = vpop.xlane.xlu0 %695
      %697 = vmax.xlane.f32.xlu0 %v694
      %v698 = vpop.xlane.xlu0 %697
      %v699 = vsub.f32 %v693, %v696
      %v700 = vsub.f32 %v694, %v698
      %v701 = vmul.f32 %v699, 1.442695
      %v702 = vpow.pop %v701
      %v703 = vmul.f32 %v700, 1.442695
      %v704 = vpow.pop %v703
      %705 = vadd.xlane.f32.xlu0 %v702
      %v706 = vpop.xlane.xlu0 %705
      %707 = vadd.xlane.f32.xlu0 %v704
      %v708 = vpop.xlane.xlu0 %707
      %v709 = vlog2.pop %v706
      %v710 = vmul.f32 %v709, 0.6931472
      %v711 = vlog2.pop %v708
      %v712 = vmul.f32 %v711, 0.6931472
      %v713 = vmul.f32 %v702, %v699
      %v714 = vmul.f32 %v704, %v700
      %715 = vadd.xlane.f32.xlu0 %v713
      %v716 = vpop.xlane.xlu0 %715
      %717 = vadd.xlane.f32.xlu0 %v714
      %v718 = vpop.xlane.xlu0 %717
      %v719 = vrcp.pop %v706
      %v720 = vmul.f32 %v706, %v719
      %v721 = vsub.f32 1.0, %v720
      %v722 = vmul.f32 %v719, %v721
      %v723 = vadd.f32 %v719, %v722
      %vm724 = vweird.f32 %v706
      %vm725 = vweird.f32 %v719
      %vm726 = vmor %vm724, %vm725
      %v727 = vsel %vm726, %v719, %v723
      %v728 = vand.u32 2147483647, %v706
      %vm729 = vcmp.eq.f32.partialorder %v728, 8.507059e+37
      %v730 = vand.u32 %v706, 2147483648
      %v731 = vor.u32 1.1754944e-38, %v730
      %v732 = vsel %vm729, %v731, %v727
      %v733 = vmul.f32 %v716, %v732
      %v734 = vrcp.pop %v708
      %v735 = vmul.f32 %v708, %v734
      %v736 = vsub.f32 1.0, %v735
      %v737 = vmul.f32 %v734, %v736
      %v738 = vadd.f32 %v734, %v737
      %vm739 = vweird.f32 %v708
      %vm740 = vweird.f32 %v734
      %vm741 = vmor %vm739, %vm740
      %v742 = vsel %vm741, %v734, %v738
      %v743 = vand.u32 2147483647, %v708
      %vm744 = vcmp.eq.f32.partialorder %v743, 8.507059e+37
      %v745 = vand.u32 %v708, 2147483648
      %v746 = vor.u32 1.1754944e-38, %v745
      %v747 = vsel %vm744, %v746, %v742
      %v748 = vmul.f32 %v718, %v747
      %v749 = vsub.f32 %v710, %v733
      %v750 = vsub.f32 %v712, %v748
      %751 = vst [vmem:[%s6] sm:$0xff] %v749
      %752 = vst [vmem:[%s6 + $0x8] sm:$0xff] %v750
      %v753 = vlaneseq
      %v754 = vshrl.u32 %v753, 7
      %v755 = vadd.s32 %v754, 8
      %s756 = sld [smem:[#allocation2]]
      %v757 = vstv %s756
      %vm758 = vcmp.lt.f32.partialorder %v749, %v757
      %vm759 = vcmp.lt.f32.partialorder %v750, %v757
      %s760 = sld [smem:[#allocation3]]
      %v761 = vstv %s760
      %vm762 = vcmp.lt.s32.totalorder %v754, %v761
      %vm763 = vcmp.lt.s32.totalorder %v755, %v761
      %vm764 = vmand %vm758, %vm762
      %vm765 = vmand %vm759, %vm763
      %v766 = vsel %vm764, 1, 0
      %v767 = vsel %vm765, 1, 0
      %v768 = vcvt.s32.f32 %v766
      %v769 = vcvt.s32.f32 %v767
      %vm770 = vcmask 7168
      %v771 = vsel %vm770, %v768, 0.0
      %v772 = vsel %vm770, %v769, 0.0
      %v773 = vadd.f32 %v771, %v772
      %774 = vadd.xlane.f32.xlu0 %v773
      %v775 = vpop.xlane.xlu0 %774
      %v776 = vrot.slane %v775, 4
      %v777 = vadd.f32 %v775, %v776
      %v778 = vrot.slane %v777, 2
      %v779 = vadd.f32 %v777, %v778
      %v780 = vrot.slane %v779, 1
      %v781 = vadd.f32 %v779, %v780
      %s782 = vtos %v781
      %v783 = vsel %vm764, %v749, 0.0
      %v784 = vsel %vm765, %v750, 0.0
      %v785 = vsel %vm770, %v783, 0.0
      %v786 = vsel %vm770, %v784, 0.0
      %v787 = vadd.f32 %v785, %v786
      %788 = vadd.xlane.f32.xlu0 %v787
      %v789 = vpop.xlane.xlu0 %788
      %v790 = vrot.slane %v789, 4
      %v791 = vadd.f32 %v789, %v790
      %v792 = vrot.slane %v791, 2
      %v793 = vadd.f32 %v791, %v792
      %v794 = vrot.slane %v793, 1
      %v795 = vadd.f32 %v793, %v794
      %s796 = vtos %v795
      %v797 = vstv %s782
      %v798 = vrcp.pop %v797
      %v799 = vmul.f32 %v797, %v798
      %v800 = vsub.f32 1.0, %v799
      %v801 = vmul.f32 %v798, %v800
      %v802 = vadd.f32 %v798, %v801
      %vm803 = vweird.f32 %v797
      %vm804 = vweird.f32 %v798
      %vm805 = vmor %vm803, %vm804
      %v806 = vsel %vm805, %v798, %v802
      %v807 = vand.u32 2147483647, %v797
      %vm808 = vcmp.eq.f32.partialorder %v807, 8.507059e+37
      %v809 = vand.u32 %v797, 2147483648
      %v810 = vor.u32 1.1754944e-38, %v809
      %v811 = vsel %vm808, %v810, %v806
      %s812 = vtos %v811
      %s813 = smul.f32 %s796, %s812
      %s814 = scalar_lea.smem [#allocation4], 0
      %815 = sst [smem:[%s814]] %s813
    $region29: #{dct_forward.1} parent=1 // pred_fallthru
      _
    // Predicated region
    $region30: #{dct_forward.1} parent=1 // pred_check
      _
    $region31: #{dct_forward.1} parent=1 // pred_check_branch
      %817 = sbr.rel (0) target = $region33
    $region32: #{dct_forward.1} parent=1 // pred_region
      _
    $region33: #{dct_forward.1} parent=1 // pred_fallthru
      _
    // Predicated region
    $region34: #{dct_forward.1} parent=1 // pred_check
      _
    $region35: #{dct_forward.1} parent=1 // pred_check_branch
      %819 = sbr.rel (0) target = $region37
    $region36: #{dct_forward.1} parent=1 // pred_region
      _
    $region37: #{dct_forward.1} parent=1 // pred_fallthru
      _
    // Predicated region
    $region38: #{dct_forward.1} parent=1 // pred_check
      _
    $region39: #{dct_forward.1} parent=1 // pred_check_branch
      %821 = sbr.rel (0) target = $region41
    $region40: #{dct_forward.1} parent=1 // pred_region
      %823 = vsyncadd [#allocation5], 0
      %s825 = sshll.u32 %s7, 4
      %s826 = int_to_ptr.hbm [resolvable:$true] %s825
      %828 = dma.smem_to_hbm [#allocation4], 16, %s826, [#allocation5]
    $region41: #{dct_forward.1} parent=1 // pred_fallthru
      _
    // Predicated region
    $region42: #{dct_forward.1} parent=1 // pred_check
      _
    $region43: #{dct_forward.1} parent=1 // pred_check_branch
      %830 = sbr.rel (0) target = $region45
    $region44: #{dct_forward.1} parent=1 // pred_region
      _
    $region45: #{dct_forward.1} parent=1 // pred_fallthru
      _
    // Predicated region
    $region46: #{dct_forward.1} parent=1 // pred_check
      _
    $region47: #{dct_forward.1} parent=1 // pred_check_branch
      %832 = sbr.rel (0) target = $region49
    $region48: #{dct_forward.1} parent=1 // pred_region
      _
    $region49: #{dct_forward.1} parent=1 // pred_fallthru
      _
    // Predicated region
    $region50: #{dct_forward.1} parent=1 // pred_check
      _
    $region51: #{dct_forward.1} parent=1 // pred_check_branch
      %834 = sbr.rel (0) target = $region53
    $region52: #{dct_forward.1} parent=1 // pred_region
      %836 = dma.done [#allocation5], 16
    $region53: #{dct_forward.1} parent=1 // pred_fallthru
      _
    %837 = sfence
    %838 = vsyncpa [#allocation5], 1

</llo_original>
